<compile_context>
chip_gen: v6e
topology: v6e:2x2x1
jax: 0.10.0
libtpu: 0.0.40
codegen_flags: <defaults>
</compile_context>

<pallas_src>
import functools

import jax
import jax.numpy as jnp
from jax.experimental import pallas as pl
from jax.experimental.pallas import tpu as pltpu


def _round_up(n, m):
    return ((n + m - 1) // m) * m


def _kan_kernel(xt_ref, w_ref, b_ref, o_ref, ft_ref, fmm_ref, *, num_harmonics):
    # xt_ref  : (D, tm)      transposed input tile (block constant across j)
    # w_ref   : (K_pad, tn)  stacked [cos; sin] weights (zero-padded rows/cols)
    # b_ref   : (1, tn)      bias tile (f32)
    # o_ref   : (tm, tn)     output tile
    # ft_ref  : (K_pad, tm)  f32 scratch: features with batch on the lane axis
    # fmm_ref : (tm, K_pad)  MXU-dtype scratch: transposed features for the MXU
    j = pl.program_id(1)
    D, tm = xt_ref.shape
    H = num_harmonics
    K = 2 * H * D
    K_pad, _ = ft_ref.shape

    # Build the Fourier features only once per batch tile (j == 0); they are
    # reused unchanged for every output-column tile j.
    @pl.when(j == 0)
    def _build_features():
        x = xt_ref[...]                     # (D, tm): full 128-lane occupancy
        c1 = jnp.cos(x)                     # EUP: one cos per element
        s1 = jnp.sin(x)                     # EUP: one sin per element
        two_c1 = 2.0 * c1

        # Row layout (matches prepare_kan_params):
        #   ft[h*D + d,        m] = cos((h+1) * x[m, d])
        #   ft[H*D + h*D + d,  m] = sin((h+1) * x[m, d])
        ft_ref[pl.ds(0, D), :] = c1
        ft_ref[pl.ds(H * D, D), :] = s1

        cos_prev, sin_prev = jnp.ones_like(x), jnp.zeros_like(x)   # k = 0
        cos_k, sin_k = c1, s1                                      # k = 1
        for h in range(1, H):
            # cos((k+1)x) = 2 cos(x) cos(kx) - cos((k-1)x)  (VPU only, f32)
            cos_next = two_c1 * cos_k - cos_prev
            sin_next = two_c1 * sin_k - sin_prev
            ft_ref[pl.ds(h * D, D), :] = cos_next
            ft_ref[pl.ds((H + h) * D, D), :] = sin_next
            cos_prev, sin_prev = cos_k, sin_k
            cos_k, sin_k = cos_next, sin_next

        if K_pad > K:   # zero K padding so padded lanes of fmm are clean
            ft_ref[pl.ds(K, K_pad - K), :] = jnp.zeros(
                (K_pad - K, tm), ft_ref.dtype)

        # One amortized, lane-aligned transpose (XLU) + single cast to the
        # MXU dtype; standard-orientation matmul afterwards.
        for kk in range(0, K_pad, 128):
            blk = ft_ref[pl.ds(kk, 128), :]                     # (128, tm) f32
            fmm_ref[:, pl.ds(kk, 128)] = jnp.transpose(blk).astype(fmm_ref.dtype)

    y = jnp.dot(fmm_ref[...], w_ref[...], preferred_element_type=jnp.float32)
    o_ref[...] = (y + b_ref[...]).astype(o_ref.dtype)


def prepare_kan_params(fourier_coeffs, bias, mxu_dtype=jnp.bfloat16, lane=128):
    """One-time parameter prep (NOT in the per-call hot path).

    Stacks / pre-transposes the coefficients into a single matmul operand
    W[c*H*D + h*D + d, o] = fourier_coeffs[c, o, d, h], zero-pads both K and O
    up to multiples of 128 (lane-dense, unmasked loads, exact result), and
    stores W in the MXU dtype so HBM only ever holds the narrow copy.
    """
    c2, O, D, H = fourier_coeffs.shape
    assert c2 == 2
    K = 2 * H * D
    K_pad = _round_up(K, lane)
    O_pad = _round_up(O, lane)
    # (2, O, D, H) -> (2, H, D, O) -> (K, O)
    w = jnp.transpose(fourier_coeffs, (0, 3, 2, 1)).reshape(K, O)
    w = jnp.pad(w, ((0, K_pad - K), (0, O_pad - O))).astype(mxu_dtype)
    b = jnp.pad(bias.astype(jnp.float32), ((0, 0), (0, O_pad - O)))
    return w, b


def _choose_tiles(B, D, K_pad, O_pad, mxu_bytes, tm, tn):
    vmem_budget = 48 * 1024 * 1024        # conservative: fits v7x's 64 MiB VMEM
    w_resident_limit = 12 * 1024 * 1024   # keep full W resident when modest

    if tn is None:
        if K_pad * O_pad * mxu_bytes <= w_resident_limit:
            tn = O_pad        # single j step -> W block index constant -> resident
        elif O_pad % 256 == 0:
            tn = 256          # match the 256-wide MXU on v6e/v7x
        else:
            tn = 128
        # If the j-loop survives and profiling shows exposed W DMA, a deeper
        # pipeline (pipeline_mode=pl.Buffered(3) on the W BlockSpec) is cheap
        # insurance; omitted here since the resident path covers typical sizes.

    if tm is None:
        tm = min(512, _round_up(B, 128))
    tm = max(128, _round_up(tm, 128))     # lane-dense feature phase; bf16 packing

    def footprint(tm_):
        return (2 * D * tm_ * 4                 # xt blocks (double buffered)
                + 2 * K_pad * tn * mxu_bytes    # W blocks
                + 2 * tn * 4                    # bias blocks
                + 2 * tm_ * tn * 4              # output blocks
                + K_pad * tm_ * 4               # ft scratch (f32)
                + tm_ * K_pad * mxu_bytes)      # fmm scratch (MXU dtype)

    while tm > 128 and footprint(tm) > vmem_budget:
        tm -= 128
    vmem_limit = int(min(vmem_budget, footprint(tm) + (4 << 20)))
    return tm, tn, vmem_limit


@functools.partial(
    jax.jit, static_argnames=("output_dim", "num_harmonics", "tm", "tn"))
def kan_forward(x, w_stacked, bias_padded, *, output_dim, num_harmonics,
                tm=None, tn=None):
    """x: (B, D) float; w_stacked: (K_pad, O_pad) in MXU dtype; bias: (1, O_pad)."""
    x = x.astype(jnp.float32)
    B, D = x.shape
    H = num_harmonics
    K = 2 * H * D
    K_pad, O_pad = w_stacked.shape
    assert K_pad == _round_up(K, 128), "w_stacked rows must be round_up(2*H*D, 128)"
    assert bias_padded.shape == (1, O_pad)
    mxu_bytes = jnp.dtype(w_stacked.dtype).itemsize

    tm, tn, vmem_limit = _choose_tiles(B, D, K_pad, O_pad, mxu_bytes, tm, tn)
    assert tm % 128 == 0
    assert O_pad % tn == 0, "tn must divide O_pad (multiple of 128)"

    B_pad = _round_up(B, tm)
    # Pad the batch and transpose once in XLA so the kernel sees the batch on
    # the 128-lane axis (D*B*4 bytes of extra traffic, tiny vs. the output).
    xt = jnp.pad(x, ((0, B_pad - B), (0, 0))).T          # (D, B_pad)

    grid = (B_pad // tm, O_pad // tn)
    kernel = functools.partial(_kan_kernel, num_harmonics=H)

    out = pl.pallas_call(
        kernel,
        out_shape=jax.ShapeDtypeStruct((B_pad, O_pad), jnp.float32),
        grid_spec=pltpu.PrefetchScalarGridSpec(
            num_scalar_prefetch=0,
            grid=grid,
            in_specs=[
                pl.BlockSpec((D, tm), lambda i, j: (0, i)),      # xt: same block ∀ j
                pl.BlockSpec((K_pad, tn), lambda i, j: (0, j)),  # W: resident if tn==O_pad
                pl.BlockSpec((1, tn), lambda i, j: (0, j)),      # bias
            ],
            out_specs=pl.BlockSpec((tm, tn), lambda i, j: (i, j)),
            scratch_shapes=[
                pltpu.VMEM((K_pad, tm), jnp.float32),            # ft (lane-dense build)
                pltpu.VMEM((tm, K_pad), w_stacked.dtype),        # fmm (MXU operand)
            ],
        ),
        compiler_params=pltpu.CompilerParams(
            # Batch axis split across TensorCores (v7x megacore); output axis
            # must stay sequential per batch tile (feature scratch reuse).
            dimension_semantics=("parallel", "arbitrary"),
            vmem_limit_bytes=vmem_limit,
        ),
        cost_estimate=pl.CostEstimate(
            flops=2 * B_pad * K_pad * O_pad,
            transcendentals=2 * B_pad * D,
            bytes_accessed=(B_pad * D * 4 + K_pad * O_pad * mxu_bytes
                            + O_pad * 4 + B_pad * O_pad * 4),
        ),
    )(xt, w_stacked, bias_padded)

    return out[:B, :output_dim]


def kan_reference(x, fourier_coeffs, bias, num_harmonics):
    """Pure-JAX reference mirroring the PyTorch forward exactly."""
    B, D = x.shape
    H = num_harmonics
    xv = x.reshape(B, D, 1)
    k = jnp.arange(1, H + 1, dtype=x.dtype).reshape(1, 1, H)
    cos_terms = jnp.cos(k * xv)
    sin_terms = jnp.sin(k * xv)
    y_cos = jnp.einsum("bij,oij->bo", cos_terms, fourier_coeffs[0])
    y_sin = jnp.einsum("bij,oij->bo", sin_terms, fourier_coeffs[1])
    return y_cos + y_sin + bias


if __name__ == "__main__":
    # Small shapes consistent with the module: x is (batch, input_dim).
    batch = 8
    input_dim = 16
    output_dim = 32
    num_harmonics = 5

    key = jax.random.PRNGKey(0)
    kx_, kc_ = jax.random.split(key)

    x = jax.random.normal(kx_, (batch, input_dim), dtype=jnp.float32)
    fourier_coeffs = (
        jax.random.normal(
            kc_, (2, output_dim, input_dim, num_harmonics), dtype=jnp.float32
        )
        / jnp.sqrt(input_dim * num_harmonics)
    )
    bias = jnp.zeros((1, output_dim), dtype=jnp.float32)   # module init: zeros

    ref = kan_reference(x, fourier_coeffs, bias, num_harmonics)

    # Default bf16 MXU path (f32 accumulation): bf16-appropriate tolerance.
    w_bf16, b_pad = prepare_kan_params(fourier_coeffs, bias,
                                       mxu_dtype=jnp.bfloat16)
    out_bf16 = jax.block_until_ready(
        kan_forward(x, w_bf16, b_pad,
                    output_dim=output_dim, num_harmonics=num_harmonics))
    assert out_bf16.shape == (batch, output_dim)
    assert jnp.allclose(out_bf16, ref, atol=3e-2, rtol=3e-2), (
        f"bf16 max abs err = {jnp.max(jnp.abs(out_bf16 - ref))}")

    # f32 MXU path: strict numerical check of the kernel math.
    w_f32, b_pad32 = prepare_kan_params(fourier_coeffs, bias,
                                        mxu_dtype=jnp.float32)
    out_f32 = jax.block_until_ready(
        kan_forward(x, w_f32, b_pad32,
                    output_dim=output_dim, num_harmonics=num_harmonics))
    assert jnp.allclose(out_f32, ref, atol=5e-4, rtol=5e-4), (
        f"f32 max abs err = {jnp.max(jnp.abs(out_f32 - ref))}")

    print("KERNEL_OK")
</pallas_src>

<mosaic_0001>
module attributes {stable_mosaic.version = 11 : i64} {
  func.func @_kan_kernel(%arg0: i32, %arg1: i32, %arg2: memref<16x128xf32, #tpu.memory_space<vmem>>, %arg3: memref<256x128xbf16, #tpu.memory_space<vmem>>, %arg4: memref<1x128xf32, #tpu.memory_space<vmem>>, %arg5: memref<128x128xf32, #tpu.memory_space<vmem>>, %arg6: memref<256x128xf32, #tpu.memory_space<vmem>>, %arg7: memref<128x256xbf16, #tpu.memory_space<vmem>>) attributes {dimension_semantics = [#tpu.dimension_semantics<parallel>, #tpu.dimension_semantics<arbitrary>], iteration_bounds = array<i64: 1, 1>, scalar_prefetch = 0 : i64, scratch_operands = 2 : i64, tpu.core_type = #tpu.core_type<tc>, window_params = [{transform_indices = @transform_0, window_bounds = array<i64: 16, 128>}, {transform_indices = @transform_1, window_bounds = array<i64: 256, 128>}, {transform_indices = @transform_2, window_bounds = array<i64: 1, 128>}, {transform_indices = @transform_3, window_bounds = array<i64: 128, 128>}]} {
    %c0_i32 = arith.constant 0 : i32
    %0 = arith.cmpi eq, %arg1, %c0_i32 : i32
    %1 = arith.extui %0 : i1 to i32
    %c0_i32_0 = arith.constant 0 : i32
    %2 = arith.cmpi ne, %1, %c0_i32_0 : i32
    scf.if %2 {
      %c0_8 = arith.constant 0 : index
      %c0_9 = arith.constant 0 : index
      %10 = vector.load %arg2[%c0_8, %c0_9] : memref<16x128xf32, #tpu.memory_space<vmem>>, vector<16x128xf32>
      %11 = math.cos %10 : vector<16x128xf32>
      %12 = math.sin %10 : vector<16x128xf32>
      %cst_10 = arith.constant 2.000000e+00 : f32
      %13 = vector.broadcast %cst_10 : f32 to vector<16x128xf32>
      %14 = arith.mulf %13, %11 : vector<16x128xf32>
      %c0_11 = arith.constant 0 : index
      %c0_12 = arith.constant 0 : index
      %15 = vector.load %arg6[%c0_11, %c0_12] : memref<256x128xf32, #tpu.memory_space<vmem>>, vector<16x128xf32>
      tpu.vector_store %arg6[%c0_11, %c0_12], %11 {strides = array<i32>} : memref<256x128xf32, #tpu.memory_space<vmem>>, vector<16x128xf32>,
      %c80 = arith.constant 80 : index
      %c0_13 = arith.constant 0 : index
      %16 = vector.load %arg6[%c80, %c0_13] : memref<256x128xf32, #tpu.memory_space<vmem>>, vector<16x128xf32>
      tpu.vector_store %arg6[%c80, %c0_13], %12 {strides = array<i32>} : memref<256x128xf32, #tpu.memory_space<vmem>>, vector<16x128xf32>,
      %cst_14 = arith.constant 1.000000e+00 : f32
      %17 = vector.broadcast %cst_14 : f32 to vector<16x128xf32>
      %cst_15 = arith.constant 0.000000e+00 : f32
      %18 = vector.broadcast %cst_15 : f32 to vector<16x128xf32>
      %19 = arith.mulf %14, %11 : vector<16x128xf32>
      %20 = arith.subf %19, %17 : vector<16x128xf32>
      %21 = arith.mulf %14, %12 : vector<16x128xf32>
      %22 = arith.subf %21, %18 : vector<16x128xf32>
      %c16 = arith.constant 16 : index
      %c0_16 = arith.constant 0 : index
      %23 = vector.load %arg6[%c16, %c0_16] : memref<256x128xf32, #tpu.memory_space<vmem>>, vector<16x128xf32>
      tpu.vector_store %arg6[%c16, %c0_16], %20 {strides = array<i32>} : memref<256x128xf32, #tpu.memory_space<vmem>>, vector<16x128xf32>,
      %c96 = arith.constant 96 : index
      %c0_17 = arith.constant 0 : index
      %24 = vector.load %arg6[%c96, %c0_17] : memref<256x128xf32, #tpu.memory_space<vmem>>, vector<16x128xf32>
      tpu.vector_store %arg6[%c96, %c0_17], %22 {strides = array<i32>} : memref<256x128xf32, #tpu.memory_space<vmem>>, vector<16x128xf32>,
      %25 = arith.mulf %14, %20 : vector<16x128xf32>
      %26 = arith.subf %25, %11 : vector<16x128xf32>
      %27 = arith.mulf %14, %22 : vector<16x128xf32>
      %28 = arith.subf %27, %12 : vector<16x128xf32>
      %c32 = arith.constant 32 : index
      %c0_18 = arith.constant 0 : index
      %29 = vector.load %arg6[%c32, %c0_18] : memref<256x128xf32, #tpu.memory_space<vmem>>, vector<16x128xf32>
      tpu.vector_store %arg6[%c32, %c0_18], %26 {strides = array<i32>} : memref<256x128xf32, #tpu.memory_space<vmem>>, vector<16x128xf32>,
      %c112 = arith.constant 112 : index
      %c0_19 = arith.constant 0 : index
      %30 = vector.load %arg6[%c112, %c0_19] : memref<256x128xf32, #tpu.memory_space<vmem>>, vector<16x128xf32>
      tpu.vector_store %arg6[%c112, %c0_19], %28 {strides = array<i32>} : memref<256x128xf32, #tpu.memory_space<vmem>>, vector<16x128xf32>,
      %31 = arith.mulf %14, %26 : vector<16x128xf32>
      %32 = arith.subf %31, %20 : vector<16x128xf32>
      %33 = arith.mulf %14, %28 : vector<16x128xf32>
      %34 = arith.subf %33, %22 : vector<16x128xf32>
      %c48 = arith.constant 48 : index
      %c0_20 = arith.constant 0 : index
      %35 = vector.load %arg6[%c48, %c0_20] : memref<256x128xf32, #tpu.memory_space<vmem>>, vector<16x128xf32>
      tpu.vector_store %arg6[%c48, %c0_20], %32 {strides = array<i32>} : memref<256x128xf32, #tpu.memory_space<vmem>>, vector<16x128xf32>,
      %c128 = arith.constant 128 : index
      %c0_21 = arith.constant 0 : index
      %36 = vector.load %arg6[%c128, %c0_21] : memref<256x128xf32, #tpu.memory_space<vmem>>, vector<16x128xf32>
      tpu.vector_store %arg6[%c128, %c0_21], %34 {strides = array<i32>} : memref<256x128xf32, #tpu.memory_space<vmem>>, vector<16x128xf32>,
      %37 = arith.mulf %14, %32 : vector<16x128xf32>
      %38 = arith.subf %37, %26 : vector<16x128xf32>
      %39 = arith.mulf %14, %34 : vector<16x128xf32>
      %40 = arith.subf %39, %28 : vector<16x128xf32>
      %c64 = arith.constant 64 : index
      %c0_22 = arith.constant 0 : index
      %41 = vector.load %arg6[%c64, %c0_22] : memref<256x128xf32, #tpu.memory_space<vmem>>, vector<16x128xf32>
      tpu.vector_store %arg6[%c64, %c0_22], %38 {strides = array<i32>} : memref<256x128xf32, #tpu.memory_space<vmem>>, vector<16x128xf32>,
      %c144 = arith.constant 144 : index
      %c0_23 = arith.constant 0 : index
      %42 = vector.load %arg6[%c144, %c0_23] : memref<256x128xf32, #tpu.memory_space<vmem>>, vector<16x128xf32>
      tpu.vector_store %arg6[%c144, %c0_23], %40 {strides = array<i32>} : memref<256x128xf32, #tpu.memory_space<vmem>>, vector<16x128xf32>,
      %cst_24 = arith.constant 0.000000e+00 : f32
      %43 = vector.broadcast %cst_24 : f32 to vector<96x128xf32>
      %c160 = arith.constant 160 : index
      %c0_25 = arith.constant 0 : index
      %44 = vector.load %arg6[%c160, %c0_25] : memref<256x128xf32, #tpu.memory_space<vmem>>, vector<96x128xf32>
      tpu.vector_store %arg6[%c160, %c0_25], %43 {strides = array<i32>} : memref<256x128xf32, #tpu.memory_space<vmem>>, vector<96x128xf32>,
      %c0_26 = arith.constant 0 : index
      %c0_27 = arith.constant 0 : index
      %45 = vector.load %arg6[%c0_26, %c0_27] : memref<256x128xf32, #tpu.memory_space<vmem>>, vector<128x128xf32>
      %46 = tpu.transpose %45, [1, 0] : vector<128x128xf32> -> vector<128x128xf32>
      %47 = arith.truncf %46 : vector<128x128xf32> to vector<128x128xbf16>
      %c0_28 = arith.constant 0 : index
      %c0_29 = arith.constant 0 : index
      %48 = vector.load %arg7[%c0_28, %c0_29] : memref<128x256xbf16, #tpu.memory_space<vmem>>, vector<128x128xbf16>
      tpu.vector_store %arg7[%c0_28, %c0_29], %47 {strides = array<i32>} : memref<128x256xbf16, #tpu.memory_space<vmem>>, vector<128x128xbf16>,
      %c128_30 = arith.constant 128 : index
      %c0_31 = arith.constant 0 : index
      %49 = vector.load %arg6[%c128_30, %c0_31] : memref<256x128xf32, #tpu.memory_space<vmem>>, vector<128x128xf32>
      %50 = tpu.transpose %49, [1, 0] : vector<128x128xf32> -> vector<128x128xf32>
      %51 = arith.truncf %50 : vector<128x128xf32> to vector<128x128xbf16>
      %c0_32 = arith.constant 0 : index
      %c128_33 = arith.constant 128 : index
      %52 = vector.load %arg7[%c0_32, %c128_33] : memref<128x256xbf16, #tpu.memory_space<vmem>>, vector<128x128xbf16>
      tpu.vector_store %arg7[%c0_32, %c128_33], %51 {strides = array<i32>} : memref<128x256xbf16, #tpu.memory_space<vmem>>, vector<128x128xbf16>,
    } else {
    }
    %c0 = arith.constant 0 : index
    %c0_1 = arith.constant 0 : index
    %3 = vector.load %arg7[%c0, %c0_1] : memref<128x256xbf16, #tpu.memory_space<vmem>>, vector<128x256xbf16>
    %c0_2 = arith.constant 0 : index
    %c0_3 = arith.constant 0 : index
    %4 = vector.load %arg3[%c0_2, %c0_3] : memref<256x128xbf16, #tpu.memory_space<vmem>>, vector<256x128xbf16>
    %cst = arith.constant dense<0.000000e+00> : vector<128x128xf32>
    %5 = tpu.matmul %3, %4, %cst {dimension_numbers = #tpu.dot_dimension_numbers<[1], [0], [0], [1], [0, 0, 1, 1], [], []>} : vector<128x256xbf16>, vector<256x128xbf16>, vector<128x128xf32> -> vector<128x128xf32>
    %c0_4 = arith.constant 0 : index
    %c0_5 = arith.constant 0 : index
    %6 = vector.load %arg4[%c0_4, %c0_5] : memref<1x128xf32, #tpu.memory_space<vmem>>, vector<1x128xf32>
    %7 = vector.broadcast %6 : vector<1x128xf32> to vector<128x128xf32>
    %8 = arith.addf %5, %7 : vector<128x128xf32>
    %c0_6 = arith.constant 0 : index
    %c0_7 = arith.constant 0 : index
    %9 = vector.load %arg5[%c0_6, %c0_7] : memref<128x128xf32, #tpu.memory_space<vmem>>, vector<128x128xf32>
    tpu.vector_store %arg5[%c0_6, %c0_7], %8 {strides = array<i32>} : memref<128x128xf32, #tpu.memory_space<vmem>>, vector<128x128xf32>,
    return
  }
  func.func @transform_0(%arg0: i32, %arg1: i32) -> (i32, i32) {
    %c0_i32 = arith.constant 0 : i32
    %c0_i32_0 = arith.constant 0 : i32
    return %c0_i32, %arg0 : i32, i32
  }
  func.func @transform_1(%arg0: i32, %arg1: i32) -> (i32, i32) {
    %c0_i32 = arith.constant 0 : i32
    %c0_i32_0 = arith.constant 0 : i32
    return %c0_i32, %arg1 : i32, i32
  }
  func.func @transform_2(%arg0: i32, %arg1: i32) -> (i32, i32) {
    %c0_i32 = arith.constant 0 : i32
    %c0_i32_0 = arith.constant 0 : i32
    return %c0_i32, %arg1 : i32, i32
  }
  func.func @transform_3(%arg0: i32, %arg1: i32) -> (i32, i32) {
    %c0_i32 = arith.constant 0 : i32
    return %arg0, %arg1 : i32, i32
  }
}

</mosaic_0001>

<llo_original>
// kernel: kan_forward.1
$region0: #{kan_forward.1}
  #allocation0 [shape = 'u32[]', space=smem, size = 0x4, offset = 0x4, fixed_abs, tag = 'smem constant byte address 0x4 - core index']
  #allocation1 [shape = 'u32[144,128]{1,0:T(1,128)}', space=vmem, size = 0x12000, scoped, tag = 'internal scratch']
  #allocation2 [shape = 'f32[256,128]{1,0:T(8,128)}', space=vmem, size = 0x20000, scoped, tag = 'scratch operand']
  #allocation3 [shape = 'bf16[128,256]{1,0:T(8,128)(2,1)}', space=vmem, size = 0x10000, scoped, tag = 'scratch operand']
  %s0 = inlined_call_operand.vmem [shape: f32[16,128], index: 0, kind: input, shape index: {}]
  %s1 = inlined_call_operand.hbm [shape: bf16[256,128], index: 1, kind: input, shape index: {}]
  %s2 = inlined_call_operand.vmem [shape: f32[1,128], index: 2, kind: input, shape index: {}]
  %s3 = inlined_call_operand.vmem [shape: f32[128,128], index: 3, kind: output, shape index: {}]
  %s4 = sld [smem:[#allocation0]]
  $region30: #{kan_forward.1} parent=0
    _
  %s6 = ssub.s32 1, %s4
  %s7 = scalar_select 0, %s6, %s4
  $region1: #{kan_forward.1} parent=0
    #allocation4 [shape = 'u8[65536]{0}', space=vmem, size = 0x10000, scoped, tag = 'input window, operand 1, single buffered']
    #allocation5 [shape = 's32[1]{0}', space=sflag, size = 0x4, scoped, tag = 'scoped memory for kan_forward.1']
    %8 = vsyncpa [#allocation5], 0
    // Predicated region
    $region2: #{kan_forward.1} parent=1 // pred_check
      _
    $region3: #{kan_forward.1} parent=1 // pred_check_branch
      %10 = sbr.rel (0) target = $region5
    $region4: #{kan_forward.1} parent=1 // pred_region
      _
    $region5: #{kan_forward.1} parent=1 // pred_fallthru
      _
    // Predicated region
    $region6: #{kan_forward.1} parent=1 // pred_check
      _
    $region7: #{kan_forward.1} parent=1 // pred_check_branch
      %12 = sbr.rel (0) target = $region9
    $region8: #{kan_forward.1} parent=1 // pred_region
      %s14 = ssub.s32 2048, 2048
      %15 = vsyncadd [#allocation5], %s14
      %s16 = sshll.u32 [#allocation4], 4
      %s17 = int_to_ptr.vmem [resolvable:$true] %s16
      %22 = dma.hbm_to_vmem [thread:$0]  %s1, 2048, %s17, [#allocation5], 64, 64, 4
    $region9: #{kan_forward.1} parent=1 // pred_fallthru
      _
    // Predicated region
    $region10: #{kan_forward.1} parent=1 // pred_check
      _
    $region11: #{kan_forward.1} parent=1 // pred_check_branch
      %24 = sbr.rel (0) target = $region13
    $region12: #{kan_forward.1} parent=1 // pred_region
      _
    $region13: #{kan_forward.1} parent=1 // pred_fallthru
      _
    // Predicated region
    $region14: #{kan_forward.1} parent=1 // pred_check
      _
    $region15: #{kan_forward.1} parent=1 // pred_check_branch
      %26 = sbr.rel (0) target = $region17
    $region16: #{kan_forward.1} parent=1 // pred_region
      %27 = dma.done [#allocation5], 2048
    $region17: #{kan_forward.1} parent=1 // pred_fallthru
      _
    %p29 = scmp.eq.s32.totalorder 0, 0
    // Predicated region
    $region18: #{kan_forward.1} parent=1 // pred_check
      %p30 = pneg %p29
    $region19: #{kan_forward.1} parent=1 // pred_check_branch
      %32 = sbr.rel (%p30) target = $region21
    $region20: #{kan_forward.1} parent=1 // pred_region
      %v33 = vld [vmem:[%s0] sm:$0xff]
      %v34 = vld [vmem:[%s0 + $0x8] sm:$0xff]
      %v35 = vand.u32 2147483647, %v33
      %vm36 = vcmp.le.f32.partialorder %v35, 0.7853982
      %vm37 = vcmp.lt.s32.totalorder %v33, 0
      %v38 = vand.u32 %v33, 2139095040
      %v39 = vshrl.u32 %v38, 23
      %v40 = vsub.s32 %v39, 127
      %v41 = vand.u32 2147483647, %v33
      %v42 = vand.u32 %v41, 8388607
      %v43 = vor.u32 %v42, 8388608
      %v44 = vsub.s32 0, %v43
      %v45 = vadd.s32 %v40, 1
      %vm46 = vcmp.gt.s32.totalorder %v45, 0
      %v47 = vsel %vm46, %v45, 0
      %v48 = vshrl.u32 %v47, 5
      %v49 = vand.u32 %v47, 31
      %v50 = vsub.s32 32, %v49
      %v51 = vshrl.u32 683565275, %v50
      %v52 = vshll.u32 683565275, %v49
      %v53 = vshrl.u32 2475754826, %v50
      %v54 = vor.u32 %v52, %v53
      %v55 = vshll.u32 2475754826, %v49
      %v56 = vshrl.u32 2131351028, %v50
      %v57 = vor.u32 %v55, %v56
      %v58 = vshll.u32 2131351028, %v49
      %v59 = vshrl.u32 2102212464, %v50
      %v60 = vor.u32 %v58, %v59
      %v61 = vshll.u32 2102212464, %v49
      %v62 = vshrl.u32 920167782, %v50
      %v63 = vor.u32 %v61, %v62
      %v64 = vshll.u32 920167782, %v49
      %v65 = vshrl.u32 1326507024, %v50
      %v66 = vor.u32 %v64, %v65
      %vm67 = vcmp.lt.s32.totalorder %v48, 1
      %vm68 = vcmp.lt.s32.totalorder %v48, 2
      %vm69 = vcmp.lt.s32.totalorder %v48, 3
      %vm70 = vcmp.lt.s32.totalorder %v48, 4
      %v71 = vsel %vm67, %v51, %v54
      %v72 = vsel %vm70, %v60, 2102212464
      %v73 = vsel %vm69, %v57, %v72
      %v74 = vsel %vm68, %v71, %v73
      %v75 = vsel %vm67, %v54, %v57
      %v76 = vsel %vm70, %v63, 920167782
      %v77 = vsel %vm69, %v60, %v76
      %v78 = vsel %vm68, %v75, %v77
      %v79 = vsel %vm67, %v57, %v60
      %v80 = vsel %vm70, %v66, 1326507024
      %v81 = vsel %vm69, %v63, %v80
      %v82 = vsel %vm68, %v79, %v81
      %v83 = vshll.u32 %v43, 8
      %v84 = vmul.u32.u64.compose %v83, %v82
      %v85 = vextract.low.u32 %v84
      %v86 = vextract.high.u32 %v84
      %v87 = vmul.u32.u64.compose %v83, %v78
      %v88 = vextract.low.u32 %v87
      %v89 = vextract.high.u32 %v87
      %v90 = vmul.u32 %v83, %v74
      %v91 = vadd.s32 %v86, %v88
      %vm92 = vc.u32 %v86, %v88
      %v93 = vadd.s32 %v89, 1
      %v94 = vsel %vm92, %v93, %v89
      %v95 = vadd.s32 %v90, %v94
      %v96 = vadd.s32 %v95, 536870912
      %v97 = vshrl.u32 %v96, 30
      %v98 = vshll.u32 %v97, 30
      %v99 = vsub.s32 %v95, %v98
      %vm100 = vcmp.lt.s32.totalorder %v99, 0
      %v101 = vsub.s32 0, %v99
      %v102 = vsel %vm100, %v101, %v99
      %v103 = vclz %v102
      %v104 = vsub.s32 %v103, 2
      %vm105 = vcmp.gt.s32.totalorder 0, %v104
      %v106 = vsel %vm105, 0, %v104
      %v107 = vsub.s32 32, %v106
      %v108 = vshll.u32 %v99, %v106
      %v109 = vshrl.u32 %v91, %v107
      %v110 = vor.u32 %v108, %v109
      %v111 = vsub.s32 4294967266, %v106
      %v112 = vadd.s32 %v111, 127
      %v113 = vshll.u32 %v112, 23
      %v114 = vor.u32 4788187, %v113
      %v115 = vand.u32 2147483647, %v114
      %v117 = vcvt.s32.f32 %v110
      %v118 = vmul.f32 %v117, %v115
      %v119 = vxor.u32 %v118, 2147483648
      %v120 = vsel %vm37, %v119, %v118
      %v121 = vsub.s32 4, %v97
      %v122 = vsel %vm37, %v121, %v97
      %v123 = vsel %vm36, %v33, %v120
      %v124 = vsel %vm36, 0, %v122
      %v125 = vcosq.f32.pop %v123
      %v126 = vsinq.f32.pop %v123
      %vm127 = vweird.f32 %v33
      %v128 = vand.u32 %v124, 3
      %vm129 = vcmp.lt.s32.totalorder %v128, 2
      %vm130 = vcmp.eq.s32.totalorder %v128, 0
      %v131 = vxor.u32 %v126, 2147483648
      %v132 = vsel %vm130, %v125, %v131
      %vm133 = vcmp.eq.s32.totalorder %v128, 2
      %v134 = vxor.u32 %v125, 2147483648
      %v135 = vsel %vm133, %v134, %v126
      %v136 = vsel %vm129, %v132, %v135
      %v137 = vsel %vm127, nan, %v136
      %v138 = vand.u32 2147483647, %v34
      %vm139 = vcmp.le.f32.partialorder %v138, 0.7853982
      %vm140 = vcmp.lt.s32.totalorder %v34, 0
      %v141 = vand.u32 %v34, 2139095040
      %v142 = vshrl.u32 %v141, 23
      %v143 = vsub.s32 %v142, 127
      %v144 = vand.u32 2147483647, %v34
      %v145 = vand.u32 %v144, 8388607
      %v146 = vor.u32 %v145, 8388608
      %v147 = vsub.s32 0, %v146
      %v148 = vadd.s32 %v143, 1
      %vm149 = vcmp.gt.s32.totalorder %v148, 0
      %v150 = vsel %vm149, %v148, 0
      %v151 = vshrl.u32 %v150, 5
      %v152 = vand.u32 %v150, 31
      %v153 = vsub.s32 32, %v152
      %v154 = vshrl.u32 683565275, %v153
      %v155 = vshll.u32 683565275, %v152
      %v156 = vshrl.u32 2475754826, %v153
      %v157 = vor.u32 %v155, %v156
      %v158 = vshll.u32 2475754826, %v152
      %v159 = vshrl.u32 2131351028, %v153
      %v160 = vor.u32 %v158, %v159
      %v161 = vshll.u32 2131351028, %v152
      %v162 = vshrl.u32 2102212464, %v153
      %v163 = vor.u32 %v161, %v162
      %v164 = vshll.u32 2102212464, %v152
      %v165 = vshrl.u32 920167782, %v153
      %v166 = vor.u32 %v164, %v165
      %v167 = vshll.u32 920167782, %v152
      %v168 = vshrl.u32 1326507024, %v153
      %v169 = vor.u32 %v167, %v168
      %vm170 = vcmp.lt.s32.totalorder %v151, 1
      %vm171 = vcmp.lt.s32.totalorder %v151, 2
      %vm172 = vcmp.lt.s32.totalorder %v151, 3
      %vm173 = vcmp.lt.s32.totalorder %v151, 4
      %v174 = vsel %vm170, %v154, %v157
      %v175 = vsel %vm173, %v163, 2102212464
      %v176 = vsel %vm172, %v160, %v175
      %v177 = vsel %vm171, %v174, %v176
      %v178 = vsel %vm170, %v157, %v160
      %v179 = vsel %vm173, %v166, 920167782
      %v180 = vsel %vm172, %v163, %v179
      %v181 = vsel %vm171, %v178, %v180
      %v182 = vsel %vm170, %v160, %v163
      %v183 = vsel %vm173, %v169, 1326507024
      %v184 = vsel %vm172, %v166, %v183
      %v185 = vsel %vm171, %v182, %v184
      %v186 = vshll.u32 %v146, 8
      %v187 = vmul.u32.u64.compose %v186, %v185
      %v188 = vextract.low.u32 %v187
      %v189 = vextract.high.u32 %v187
      %v190 = vmul.u32.u64.compose %v186, %v181
      %v191 = vextract.low.u32 %v190
      %v192 = vextract.high.u32 %v190
      %v193 = vmul.u32 %v186, %v177
      %v194 = vadd.s32 %v189, %v191
      %vm195 = vc.u32 %v189, %v191
      %v196 = vadd.s32 %v192, 1
      %v197 = vsel %vm195, %v196, %v192
      %v198 = vadd.s32 %v193, %v197
      %v199 = vadd.s32 %v198, 536870912
      %v200 = vshrl.u32 %v199, 30
      %v201 = vshll.u32 %v200, 30
      %v202 = vsub.s32 %v198, %v201
      %vm203 = vcmp.lt.s32.totalorder %v202, 0
      %v204 = vsub.s32 0, %v202
      %v205 = vsel %vm203, %v204, %v202
      %v206 = vclz %v205
      %v207 = vsub.s32 %v206, 2
      %vm208 = vcmp.gt.s32.totalorder 0, %v207
      %v209 = vsel %vm208, 0, %v207
      %v210 = vsub.s32 32, %v209
      %v211 = vshll.u32 %v202, %v209
      %v212 = vshrl.u32 %v194, %v210
      %v213 = vor.u32 %v211, %v212
      %v214 = vsub.s32 4294967266, %v209
      %v215 = vadd.s32 %v214, 127
      %v216 = vshll.u32 %v215, 23
      %v217 = vor.u32 4788187, %v216
      %v218 = vand.u32 2147483647, %v217
      %v220 = vcvt.s32.f32 %v213
      %v221 = vmul.f32 %v220, %v218
      %v222 = vxor.u32 %v221, 2147483648
      %v223 = vsel %vm140, %v222, %v221
      %v224 = vsub.s32 4, %v200
      %v225 = vsel %vm140, %v224, %v200
      %v226 = vsel %vm139, %v34, %v223
      %v227 = vsel %vm139, 0, %v225
      %v228 = vcosq.f32.pop %v226
      %v229 = vsinq.f32.pop %v226
      %vm230 = vweird.f32 %v34
      %v231 = vand.u32 %v227, 3
      %vm232 = vcmp.lt.s32.totalorder %v231, 2
      %vm233 = vcmp.eq.s32.totalorder %v231, 0
      %v234 = vxor.u32 %v229, 2147483648
      %v235 = vsel %vm233, %v228, %v234
      %vm236 = vcmp.eq.s32.totalorder %v231, 2
      %v237 = vxor.u32 %v228, 2147483648
      %v238 = vsel %vm236, %v237, %v229
      %v239 = vsel %vm232, %v235, %v238
      %v240 = vsel %vm230, nan, %v239
      %v241 = vand.u32 2147483647, %v33
      %vm242 = vcmp.le.f32.partialorder %v241, 0.7853982
      %vm243 = vcmp.lt.s32.totalorder %v33, 0
      %v244 = vand.u32 %v33, 2139095040
      %v245 = vshrl.u32 %v244, 23
      %v246 = vsub.s32 %v245, 127
      %v247 = vand.u32 2147483647, %v33
      %v248 = vand.u32 %v247, 8388607
      %v249 = vor.u32 %v248, 8388608
      %v250 = vsub.s32 0, %v249
      %v251 = vadd.s32 %v246, 1
      %vm252 = vcmp.gt.s32.totalorder %v251, 0
      %v253 = vsel %vm252, %v251, 0
      %v254 = vshrl.u32 %v253, 5
      %v255 = vand.u32 %v253, 31
      %v256 = vsub.s32 32, %v255
      %v257 = vshrl.u32 683565275, %v256
      %v258 = vshll.u32 683565275, %v255
      %v259 = vshrl.u32 2475754826, %v256
      %v260 = vor.u32 %v258, %v259
      %v261 = vshll.u32 2475754826, %v255
      %v262 = vshrl.u32 2131351028, %v256
      %v263 = vor.u32 %v261, %v262
      %v264 = vshll.u32 2131351028, %v255
      %v265 = vshrl.u32 2102212464, %v256
      %v266 = vor.u32 %v264, %v265
      %v267 = vshll.u32 2102212464, %v255
      %v268 = vshrl.u32 920167782, %v256
      %v269 = vor.u32 %v267, %v268
      %v270 = vshll.u32 920167782, %v255
      %v271 = vshrl.u32 1326507024, %v256
      %v272 = vor.u32 %v270, %v271
      %vm273 = vcmp.lt.s32.totalorder %v254, 1
      %vm274 = vcmp.lt.s32.totalorder %v254, 2
      %vm275 = vcmp.lt.s32.totalorder %v254, 3
      %vm276 = vcmp.lt.s32.totalorder %v254, 4
      %v277 = vsel %vm273, %v257, %v260
      %v278 = vsel %vm276, %v266, 2102212464
      %v279 = vsel %vm275, %v263, %v278
      %v280 = vsel %vm274, %v277, %v279
      %v281 = vsel %vm273, %v260, %v263
      %v282 = vsel %vm276, %v269, 920167782
      %v283 = vsel %vm275, %v266, %v282
      %v284 = vsel %vm274, %v281, %v283
      %v285 = vsel %vm273, %v263, %v266
      %v286 = vsel %vm276, %v272, 1326507024
      %v287 = vsel %vm275, %v269, %v286
      %v288 = vsel %vm274, %v285, %v287
      %v289 = vshll.u32 %v249, 8
      %v290 = vmul.u32.u64.compose %v289, %v288
      %v291 = vextract.low.u32 %v290
      %v292 = vextract.high.u32 %v290
      %v293 = vmul.u32.u64.compose %v289, %v284
      %v294 = vextract.low.u32 %v293
      %v295 = vextract.high.u32 %v293
      %v296 = vmul.u32 %v289, %v280
      %v297 = vadd.s32 %v292, %v294
      %vm298 = vc.u32 %v292, %v294
      %v299 = vadd.s32 %v295, 1
      %v300 = vsel %vm298, %v299, %v295
      %v301 = vadd.s32 %v296, %v300
      %v302 = vadd.s32 %v301, 536870912
      %v303 = vshrl.u32 %v302, 30
      %v304 = vshll.u32 %v303, 30
      %v305 = vsub.s32 %v301, %v304
      %vm306 = vcmp.lt.s32.totalorder %v305, 0
      %v307 = vsub.s32 0, %v305
      %v308 = vsel %vm306, %v307, %v305
      %v309 = vclz %v308
      %v310 = vsub.s32 %v309, 2
      %vm311 = vcmp.gt.s32.totalorder 0, %v310
      %v312 = vsel %vm311, 0, %v310
      %v313 = vsub.s32 32, %v312
      %v314 = vshll.u32 %v305, %v312
      %v315 = vshrl.u32 %v297, %v313
      %v316 = vor.u32 %v314, %v315
      %v317 = vsub.s32 4294967266, %v312
      %v318 = vadd.s32 %v317, 127
      %v319 = vshll.u32 %v318, 23
      %v320 = vor.u32 4788187, %v319
      %v321 = vand.u32 2147483647, %v320
      %v323 = vcvt.s32.f32 %v316
      %v324 = vmul.f32 %v323, %v321
      %v325 = vxor.u32 %v324, 2147483648
      %v326 = vsel %vm243, %v325, %v324
      %v327 = vsub.s32 4, %v303
      %v328 = vsel %vm243, %v327, %v303
      %v329 = vsel %vm242, %v33, %v326
      %v330 = vsel %vm242, 0, %v328
      %v331 = vcosq.f32.pop %v329
      %v332 = vsinq.f32.pop %v329
      %vm333 = vweird.f32 %v33
      %v334 = vadd.s32 %v330, 3
      %v335 = vand.u32 %v334, 3
      %vm336 = vcmp.lt.s32.totalorder %v335, 2
      %vm337 = vcmp.eq.s32.totalorder %v335, 0
      %v338 = vxor.u32 %v332, 2147483648
      %v339 = vsel %vm337, %v331, %v338
      %vm340 = vcmp.eq.s32.totalorder %v335, 2
      %v341 = vxor.u32 %v331, 2147483648
      %v342 = vsel %vm340, %v341, %v332
      %v343 = vsel %vm336, %v339, %v342
      %v344 = vsel %vm333, nan, %v343
      %v345 = vand.u32 2147483647, %v34
      %vm346 = vcmp.le.f32.partialorder %v345, 0.7853982
      %vm347 = vcmp.lt.s32.totalorder %v34, 0
      %v348 = vand.u32 %v34, 2139095040
      %v349 = vshrl.u32 %v348, 23
      %v350 = vsub.s32 %v349, 127
      %v351 = vand.u32 2147483647, %v34
      %v352 = vand.u32 %v351, 8388607
      %v353 = vor.u32 %v352, 8388608
      %v354 = vsub.s32 0, %v353
      %v355 = vadd.s32 %v350, 1
      %vm356 = vcmp.gt.s32.totalorder %v355, 0
      %v357 = vsel %vm356, %v355, 0
      %v358 = vshrl.u32 %v357, 5
      %v359 = vand.u32 %v357, 31
      %v360 = vsub.s32 32, %v359
      %v361 = vshrl.u32 683565275, %v360
      %v362 = vshll.u32 683565275, %v359
      %v363 = vshrl.u32 2475754826, %v360
      %v364 = vor.u32 %v362, %v363
      %v365 = vshll.u32 2475754826, %v359
      %v366 = vshrl.u32 2131351028, %v360
      %v367 = vor.u32 %v365, %v366
      %v368 = vshll.u32 2131351028, %v359
      %v369 = vshrl.u32 2102212464, %v360
      %v370 = vor.u32 %v368, %v369
      %v371 = vshll.u32 2102212464, %v359
      %v372 = vshrl.u32 920167782, %v360
      %v373 = vor.u32 %v371, %v372
      %v374 = vshll.u32 920167782, %v359
      %v375 = vshrl.u32 1326507024, %v360
      %v376 = vor.u32 %v374, %v375
      %vm377 = vcmp.lt.s32.totalorder %v358, 1
      %vm378 = vcmp.lt.s32.totalorder %v358, 2
      %vm379 = vcmp.lt.s32.totalorder %v358, 3
      %vm380 = vcmp.lt.s32.totalorder %v358, 4
      %v381 = vsel %vm377, %v361, %v364
      %v382 = vsel %vm380, %v370, 2102212464
      %v383 = vsel %vm379, %v367, %v382
      %v384 = vsel %vm378, %v381, %v383
      %v385 = vsel %vm377, %v364, %v367
      %v386 = vsel %vm380, %v373, 920167782
      %v387 = vsel %vm379, %v370, %v386
      %v388 = vsel %vm378, %v385, %v387
      %v389 = vsel %vm377, %v367, %v370
      %v390 = vsel %vm380, %v376, 1326507024
      %v391 = vsel %vm379, %v373, %v390
      %v392 = vsel %vm378, %v389, %v391
      %v393 = vshll.u32 %v353, 8
      %v394 = vmul.u32.u64.compose %v393, %v392
      %v395 = vextract.low.u32 %v394
      %v396 = vextract.high.u32 %v394
      %v397 = vmul.u32.u64.compose %v393, %v388
      %v398 = vextract.low.u32 %v397
      %v399 = vextract.high.u32 %v397
      %v400 = vmul.u32 %v393, %v384
      %v401 = vadd.s32 %v396, %v398
      %vm402 = vc.u32 %v396, %v398
      %v403 = vadd.s32 %v399, 1
      %v404 = vsel %vm402, %v403, %v399
      %v405 = vadd.s32 %v400, %v404
      %v406 = vadd.s32 %v405, 536870912
      %v407 = vshrl.u32 %v406, 30
      %v408 = vshll.u32 %v407, 30
      %v409 = vsub.s32 %v405, %v408
      %vm410 = vcmp.lt.s32.totalorder %v409, 0
      %v411 = vsub.s32 0, %v409
      %v412 = vsel %vm410, %v411, %v409
      %v413 = vclz %v412
      %v414 = vsub.s32 %v413, 2
      %vm415 = vcmp.gt.s32.totalorder 0, %v414
      %v416 = vsel %vm415, 0, %v414
      %v417 = vsub.s32 32, %v416
      %v418 = vshll.u32 %v409, %v416
      %v419 = vshrl.u32 %v401, %v417
      %v420 = vor.u32 %v418, %v419
      %v421 = vsub.s32 4294967266, %v416
      %v422 = vadd.s32 %v421, 127
      %v423 = vshll.u32 %v422, 23
      %v424 = vor.u32 4788187, %v423
      %v425 = vand.u32 2147483647, %v424
      %v427 = vcvt.s32.f32 %v420
      %v428 = vmul.f32 %v427, %v425
      %v429 = vxor.u32 %v428, 2147483648
      %v430 = vsel %vm347, %v429, %v428
      %v431 = vsub.s32 4, %v407
      %v432 = vsel %vm347, %v431, %v407
      %v433 = vsel %vm346, %v34, %v430
      %v434 = vsel %vm346, 0, %v432
      %v435 = vcosq.f32.pop %v433
      %v436 = vsinq.f32.pop %v433
      %vm437 = vweird.f32 %v34
      %v438 = vadd.s32 %v434, 3
      %v439 = vand.u32 %v438, 3
      %vm440 = vcmp.lt.s32.totalorder %v439, 2
      %vm441 = vcmp.eq.s32.totalorder %v439, 0
      %v442 = vxor.u32 %v436, 2147483648
      %v443 = vsel %vm441, %v435, %v442
      %vm444 = vcmp.eq.s32.totalorder %v439, 2
      %v445 = vxor.u32 %v435, 2147483648
      %v446 = vsel %vm444, %v445, %v436
      %v447 = vsel %vm440, %v443, %v446
      %v448 = vsel %vm437, nan, %v447
      %v449 = vmul.f32 %v137, 2.0
      %v450 = vmul.f32 %v240, 2.0
      %451 = vst [vmem:[#allocation2] sm:$0xff] %v137
      %452 = vst [vmem:[#allocation2 + $0x8] sm:$0xff] %v240
      %453 = vst [vmem:[#allocation2 + $0x50] sm:$0xff] %v344
      %454 = vst [vmem:[#allocation2 + $0x58] sm:$0xff] %v448
      %v455 = vmul.f32 %v449, %v137
      %v456 = vmul.f32 %v450, %v240
      %v457 = vsub.f32 %v455, 1.0
      %v458 = vsub.f32 %v456, 1.0
      %v459 = vmul.f32 %v449, %v344
      %v460 = vmul.f32 %v450, %v448
      %461 = vst [vmem:[#allocation2 + $0x10] sm:$0xff] %v457
      %462 = vst [vmem:[#allocation2 + $0x18] sm:$0xff] %v458
      %463 = vst [vmem:[#allocation2 + $0x60] sm:$0xff] %v459
      %464 = vst [vmem:[#allocation2 + $0x68] sm:$0xff] %v460
      %v465 = vmul.f32 %v449, %v457
      %v466 = vmul.f32 %v450, %v458
      %v467 = vsub.f32 %v465, %v137
      %v468 = vsub.f32 %v466, %v240
      %v469 = vmul.f32 %v449, %v459
      %v470 = vmul.f32 %v450, %v460
      %v471 = vsub.f32 %v469, %v344
      %v472 = vsub.f32 %v470, %v448
      %473 = vst [vmem:[#allocation2 + $0x20] sm:$0xff] %v467
      %474 = vst [vmem:[#allocation2 + $0x28] sm:$0xff] %v468
      %475 = vst [vmem:[#allocation2 + $0x70] sm:$0xff] %v471
      %476 = vst [vmem:[#allocation2 + $0x78] sm:$0xff] %v472
      %v477 = vmul.f32 %v449, %v467
      %v478 = vmul.f32 %v450, %v468
      %v479 = vsub.f32 %v477, %v457
      %v480 = vsub.f32 %v478, %v458
      %v481 = vmul.f32 %v449, %v471
      %v482 = vmul.f32 %v450, %v472
      %v483 = vsub.f32 %v481, %v459
      %v484 = vsub.f32 %v482, %v460
      %485 = vst [vmem:[#allocation2 + $0x30] sm:$0xff] %v479
      %486 = vst [vmem:[#allocation2 + $0x38] sm:$0xff] %v480
      %487 = vst [vmem:[#allocation2 + $0x80] sm:$0xff] %v483
      %488 = vst [vmem:[#allocation2 + $0x88] sm:$0xff] %v484
      %v489 = vmul.f32 %v449, %v479
      %v490 = vmul.f32 %v450, %v480
      %v491 = vsub.f32 %v489, %v467
      %v492 = vsub.f32 %v490, %v468
      %v493 = vmul.f32 %v449, %v483
      %v494 = vmul.f32 %v450, %v484
      %v495 = vsub.f32 %v493, %v471
      %v496 = vsub.f32 %v494, %v472
      %497 = vst [vmem:[#allocation2 + $0x40] sm:$0xff] %v491
      %498 = vst [vmem:[#allocation2 + $0x48] sm:$0xff] %v492
      %499 = vst [vmem:[#allocation2 + $0x90] sm:$0xff] %v495
      %500 = vst [vmem:[#allocation2 + $0x98] sm:$0xff] %v496
      %501 = vst [vmem:[#allocation2 + $0xa0] sm:$0xff] 0.0
      %502 = vst [vmem:[#allocation2 + $0xa8] sm:$0xff] 0.0
      %503 = vst [vmem:[#allocation2 + $0xb0] sm:$0xff] 0.0
      %504 = vst [vmem:[#allocation2 + $0xb8] sm:$0xff] 0.0
      %505 = vst [vmem:[#allocation2 + $0xc0] sm:$0xff] 0.0
      %506 = vst [vmem:[#allocation2 + $0xc8] sm:$0xff] 0.0
      %507 = vst [vmem:[#allocation2 + $0xd0] sm:$0xff] 0.0
      %508 = vst [vmem:[#allocation2 + $0xd8] sm:$0xff] 0.0
      %509 = vst [vmem:[#allocation2 + $0xe0] sm:$0xff] 0.0
      %510 = vst [vmem:[#allocation2 + $0xe8] sm:$0xff] 0.0
      %511 = vst [vmem:[#allocation2 + $0xf0] sm:$0xff] 0.0
      %512 = vst [vmem:[#allocation2 + $0xf8] sm:$0xff] 0.0
      %v513 = vld [vmem:[#allocation2] sm:$0xff]
      %v514 = vld [vmem:[#allocation2 + $0x8] sm:$0xff]
      %v515 = vld [vmem:[#allocation2 + $0x10] sm:$0xff]
      %v516 = vld [vmem:[#allocation2 + $0x18] sm:$0xff]
      %v517 = vld [vmem:[#allocation2 + $0x20] sm:$0xff]
      %v518 = vld [vmem:[#allocation2 + $0x28] sm:$0xff]
      %v519 = vld [vmem:[#allocation2 + $0x30] sm:$0xff]
      %v520 = vld [vmem:[#allocation2 + $0x38] sm:$0xff]
      %v521 = vld [vmem:[#allocation2 + $0x40] sm:$0xff]
      %v522 = vld [vmem:[#allocation2 + $0x48] sm:$0xff]
      %v523 = vld [vmem:[#allocation2 + $0x50] sm:$0xff]
      %v524 = vld [vmem:[#allocation2 + $0x58] sm:$0xff]
      %v525 = vld [vmem:[#allocation2 + $0x60] sm:$0xff]
      %v526 = vld [vmem:[#allocation2 + $0x68] sm:$0xff]
      %v527 = vld [vmem:[#allocation2 + $0x70] sm:$0xff]
      %v528 = vld [vmem:[#allocation2 + $0x78] sm:$0xff]
      %529 = vxpose.xlu0.b32.start [1/16] %v513, 128
      %530 = vxpose.xlu0.b32.cont [2/16] %v514, 128
      %531 = vxpose.xlu0.b32.cont [3/16] %v515, 128
      %532 = vxpose.xlu0.b32.cont [4/16] %v516, 128
      %533 = vxpose.xlu0.b32.cont [5/16] %v517, 128
      %534 = vxpose.xlu0.b32.cont [6/16] %v518, 128
      %535 = vxpose.xlu0.b32.cont [7/16] %v519, 128
      %536 = vxpose.xlu0.b32.cont [8/16] %v520, 128
      %537 = vxpose.xlu0.b32.cont [9/16] %v521, 128
      %538 = vxpose.xlu0.b32.cont [10/16] %v522, 128
      %539 = vxpose.xlu0.b32.cont [11/16] %v523, 128
      %540 = vxpose.xlu0.b32.cont [12/16] %v524, 128
      %541 = vxpose.xlu0.b32.cont [13/16] %v525, 128
      %542 = vxpose.xlu0.b32.cont [14/16] %v526, 128
      %543 = vxpose.xlu0.b32.cont [15/16] %v527, 128
      %544 = vxpose.xlu0.b32.end [16/16] %v528, 128
      %v545 = vpop.trf.xlu0
      %v546 = vpop.trf.xlu0
      %v547 = vpop.trf.xlu0
      %v548 = vpop.trf.xlu0
      %v549 = vpop.trf.xlu0
      %v550 = vpop.trf.xlu0
      %v551 = vpop.trf.xlu0
      %v552 = vpop.trf.xlu0
      %v553 = vpop.trf.xlu0
      %v554 = vpop.trf.xlu0
      %v555 = vpop.trf.xlu0
      %v556 = vpop.trf.xlu0
      %v557 = vpop.trf.xlu0
      %v558 = vpop.trf.xlu0
      %v559 = vpop.trf.xlu0
      %v560 = vpop.trf.xlu0
      %v561 = vpack.c.bf16 %v546, %v545
      %v562 = vpack.c.bf16 %v548, %v547
      %v563 = vpack.c.bf16 %v550, %v549
      %v564 = vpack.c.bf16 %v552, %v551
      %v565 = vpack.c.bf16 %v554, %v553
      %v566 = vpack.c.bf16 %v556, %v555
      %v567 = vpack.c.bf16 %v558, %v557
      %v568 = vpack.c.bf16 %v560, %v559
      %v577 = vunpack.c.l.b16 %v561
      %v578 = vunpack.c.h.b16 %v561
      %v579 = vunpack.c.l.b16 %v562
      %v580 = vunpack.c.h.b16 %v562
      %v581 = vunpack.c.l.b16 %v563
      %v582 = vunpack.c.h.b16 %v563
      %v583 = vunpack.c.l.b16 %v564
      %v584 = vunpack.c.h.b16 %v564
      %v585 = vunpack.c.l.b16 %v565
      %v586 = vunpack.c.h.b16 %v565
      %v587 = vunpack.c.l.b16 %v566
      %v588 = vunpack.c.h.b16 %v566
      %v589 = vunpack.c.l.b16 %v567
      %v590 = vunpack.c.h.b16 %v567
      %v591 = vunpack.c.l.b16 %v568
      %v592 = vunpack.c.h.b16 %v568
      %v593 = vpack.c.b16 %v577, %v577
      %v594 = vpack.c.b16 %v578, %v578
      %v595 = vpack.c.b16 %v579, %v579
      %v596 = vpack.c.b16 %v580, %v580
      %v597 = vpack.c.b16 %v581, %v581
      %v598 = vpack.c.b16 %v582, %v582
      %v599 = vpack.c.b16 %v583, %v583
      %v600 = vpack.c.b16 %v584, %v584
      %v601 = vpack.c.b16 %v585, %v585
      %v602 = vpack.c.b16 %v586, %v586
      %v603 = vpack.c.b16 %v587, %v587
      %v604 = vpack.c.b16 %v588, %v588
      %v605 = vpack.c.b16 %v589, %v589
      %v606 = vpack.c.b16 %v590, %v590
      %v607 = vpack.c.b16 %v591, %v591
      %v608 = vpack.c.b16 %v592, %v592
      %625 = vst [vmem:[#allocation3] sm:$0xf] %v593
      %626 = vst [vmem:[#allocation3 + $0x8] sm:$0xf] %v594
      %627 = vst [vmem:[#allocation3 + $0x10] sm:$0xf] %v595
      %628 = vst [vmem:[#allocation3 + $0x18] sm:$0xf] %v596
      %629 = vst [vmem:[#allocation3 + $0x20] sm:$0xf] %v597
      %630 = vst [vmem:[#allocation3 + $0x28] sm:$0xf] %v598
      %631 = vst [vmem:[#allocation3 + $0x30] sm:$0xf] %v599
      %632 = vst [vmem:[#allocation3 + $0x38] sm:$0xf] %v600
      %633 = vst [vmem:[#allocation3 + $0x40] sm:$0xf] %v601
      %634 = vst [vmem:[#allocation3 + $0x48] sm:$0xf] %v602
      %635 = vst [vmem:[#allocation3 + $0x50] sm:$0xf] %v603
      %636 = vst [vmem:[#allocation3 + $0x58] sm:$0xf] %v604
      %637 = vst [vmem:[#allocation3 + $0x60] sm:$0xf] %v605
      %638 = vst [vmem:[#allocation3 + $0x68] sm:$0xf] %v606
      %639 = vst [vmem:[#allocation3 + $0x70] sm:$0xf] %v607
      %640 = vst [vmem:[#allocation3 + $0x78] sm:$0xf] %v608
      %v641 = vld [vmem:[#allocation2 + $0x80] sm:$0xff]
      %v642 = vld [vmem:[#allocation2 + $0x88] sm:$0xff]
      %v643 = vld [vmem:[#allocation2 + $0x90] sm:$0xff]
      %v644 = vld [vmem:[#allocation2 + $0x98] sm:$0xff]
      %v645 = vld [vmem:[#allocation2 + $0xa0] sm:$0xff]
      %v646 = vld [vmem:[#allocation2 + $0xa8] sm:$0xff]
      %v647 = vld [vmem:[#allocation2 + $0xb0] sm:$0xff]
      %v648 = vld [vmem:[#allocation2 + $0xb8] sm:$0xff]
      %v649 = vld [vmem:[#allocation2 + $0xc0] sm:$0xff]
      %v650 = vld [vmem:[#allocation2 + $0xc8] sm:$0xff]
      %v651 = vld [vmem:[#allocation2 + $0xd0] sm:$0xff]
      %v652 = vld [vmem:[#allocation2 + $0xd8] sm:$0xff]
      %v653 = vld [vmem:[#allocation2 + $0xe0] sm:$0xff]
      %v654 = vld [vmem:[#allocation2 + $0xe8] sm:$0xff]
      %v655 = vld [vmem:[#allocation2 + $0xf0] sm:$0xff]
      %v656 = vld [vmem:[#allocation2 + $0xf8] sm:$0xff]
      %657 = vxpose.xlu0.b32.start [1/16] %v641, 128
      %658 = vxpose.xlu0.b32.cont [2/16] %v642, 128
      %659 = vxpose.xlu0.b32.cont [3/16] %v643, 128
      %660 = vxpose.xlu0.b32.cont [4/16] %v644, 128
      %661 = vxpose.xlu0.b32.cont [5/16] %v645, 128
      %662 = vxpose.xlu0.b32.cont [6/16] %v646, 128
      %663 = vxpose.xlu0.b32.cont [7/16] %v647, 128
      %664 = vxpose.xlu0.b32.cont [8/16] %v648, 128
      %665 = vxpose.xlu0.b32.cont [9/16] %v649, 128
      %666 = vxpose.xlu0.b32.cont [10/16] %v650, 128
      %667 = vxpose.xlu0.b32.cont [11/16] %v651, 128
      %668 = vxpose.xlu0.b32.cont [12/16] %v652, 128
      %669 = vxpose.xlu0.b32.cont [13/16] %v653, 128
      %670 = vxpose.xlu0.b32.cont [14/16] %v654, 128
      %671 = vxpose.xlu0.b32.cont [15/16] %v655, 128
      %672 = vxpose.xlu0.b32.end [16/16] %v656, 128
      %v673 = vpop.trf.xlu0
      %v674 = vpop.trf.xlu0
      %v675 = vpop.trf.xlu0
      %v676 = vpop.trf.xlu0
      %v677 = vpop.trf.xlu0
      %v678 = vpop.trf.xlu0
      %v679 = vpop.trf.xlu0
      %v680 = vpop.trf.xlu0
      %v681 = vpop.trf.xlu0
      %v682 = vpop.trf.xlu0
      %v683 = vpop.trf.xlu0
      %v684 = vpop.trf.xlu0
      %v685 = vpop.trf.xlu0
      %v686 = vpop.trf.xlu0
      %v687 = vpop.trf.xlu0
      %v688 = vpop.trf.xlu0
      %v689 = vpack.c.bf16 %v674, %v673
      %v690 = vpack.c.bf16 %v676, %v675
      %v691 = vpack.c.bf16 %v678, %v677
      %v692 = vpack.c.bf16 %v680, %v679
      %v693 = vpack.c.bf16 %v682, %v681
      %v694 = vpack.c.bf16 %v684, %v683
      %v695 = vpack.c.bf16 %v686, %v685
      %v696 = vpack.c.bf16 %v688, %v687
      %v705 = vunpack.c.l.b16 %v689
      %v706 = vunpack.c.h.b16 %v689
      %v707 = vunpack.c.l.b16 %v690
      %v708 = vunpack.c.h.b16 %v690
      %v709 = vunpack.c.l.b16 %v691
      %v710 = vunpack.c.h.b16 %v691
      %v711 = vunpack.c.l.b16 %v692
      %v712 = vunpack.c.h.b16 %v692
      %v713 = vunpack.c.l.b16 %v693
      %v714 = vunpack.c.h.b16 %v693
      %v715 = vunpack.c.l.b16 %v694
      %v716 = vunpack.c.h.b16 %v694
      %v717 = vunpack.c.l.b16 %v695
      %v718 = vunpack.c.h.b16 %v695
      %v719 = vunpack.c.l.b16 %v696
      %v720 = vunpack.c.h.b16 %v696
      %v721 = vpack.c.b16 %v705, %v705
      %v722 = vpack.c.b16 %v706, %v706
      %v723 = vpack.c.b16 %v707, %v707
      %v724 = vpack.c.b16 %v708, %v708
      %v725 = vpack.c.b16 %v709, %v709
      %v726 = vpack.c.b16 %v710, %v710
      %v727 = vpack.c.b16 %v711, %v711
      %v728 = vpack.c.b16 %v712, %v712
      %v729 = vpack.c.b16 %v713, %v713
      %v730 = vpack.c.b16 %v714, %v714
      %v731 = vpack.c.b16 %v715, %v715
      %v732 = vpack.c.b16 %v716, %v716
      %v733 = vpack.c.b16 %v717, %v717
      %v734 = vpack.c.b16 %v718, %v718
      %v735 = vpack.c.b16 %v719, %v719
      %v736 = vpack.c.b16 %v720, %v720
      %753 = vst [vmem:[#allocation3 + $0x4] sm:$0xf] %v721
      %754 = vst [vmem:[#allocation3 + $0xc] sm:$0xf] %v722
      %755 = vst [vmem:[#allocation3 + $0x14] sm:$0xf] %v723
      %756 = vst [vmem:[#allocation3 + $0x1c] sm:$0xf] %v724
      %757 = vst [vmem:[#allocation3 + $0x24] sm:$0xf] %v725
      %758 = vst [vmem:[#allocation3 + $0x2c] sm:$0xf] %v726
      %759 = vst [vmem:[#allocation3 + $0x34] sm:$0xf] %v727
      %760 = vst [vmem:[#allocation3 + $0x3c] sm:$0xf] %v728
      %761 = vst [vmem:[#allocation3 + $0x44] sm:$0xf] %v729
      %762 = vst [vmem:[#allocation3 + $0x4c] sm:$0xf] %v730
      %763 = vst [vmem:[#allocation3 + $0x54] sm:$0xf] %v731
      %764 = vst [vmem:[#allocation3 + $0x5c] sm:$0xf] %v732
      %765 = vst [vmem:[#allocation3 + $0x64] sm:$0xf] %v733
      %766 = vst [vmem:[#allocation3 + $0x6c] sm:$0xf] %v734
      %767 = vst [vmem:[#allocation3 + $0x74] sm:$0xf] %v735
      %768 = vst [vmem:[#allocation3 + $0x7c] sm:$0xf] %v736
    $region21: #{kan_forward.1} parent=1 // pred_fallthru
      _
    %v769 = vld [vmem:[#allocation3] sm:$0xff]
    %v770 = vld [vmem:[#allocation3 + $0x8] sm:$0xff]
    %v771 = vld [vmem:[#allocation3 + $0x10] sm:$0xff]
    %v772 = vld [vmem:[#allocation3 + $0x18] sm:$0xff]
    %v773 = vld [vmem:[#allocation3 + $0x20] sm:$0xff]
    %v774 = vld [vmem:[#allocation3 + $0x28] sm:$0xff]
    %v775 = vld [vmem:[#allocation3 + $0x30] sm:$0xff]
    %v776 = vld [vmem:[#allocation3 + $0x38] sm:$0xff]
    %v777 = vld [vmem:[#allocation3 + $0x40] sm:$0xff]
    %v778 = vld [vmem:[#allocation3 + $0x48] sm:$0xff]
    %v779 = vld [vmem:[#allocation3 + $0x50] sm:$0xff]
    %v780 = vld [vmem:[#allocation3 + $0x58] sm:$0xff]
    %v781 = vld [vmem:[#allocation3 + $0x60] sm:$0xff]
    %v782 = vld [vmem:[#allocation3 + $0x68] sm:$0xff]
    %v783 = vld [vmem:[#allocation3 + $0x70] sm:$0xff]
    %v784 = vld [vmem:[#allocation3 + $0x78] sm:$0xff]
    %v785 = vld [vmem:[#allocation4] sm:$0xf]
    %v786 = vld [vmem:[#allocation4 + $0x4] sm:$0xf]
    %v787 = vld [vmem:[#allocation4 + $0x8] sm:$0xf]
    %v788 = vld [vmem:[#allocation4 + $0xc] sm:$0xf]
    %v789 = vld [vmem:[#allocation4 + $0x10] sm:$0xf]
    %v790 = vld [vmem:[#allocation4 + $0x14] sm:$0xf]
    %v791 = vld [vmem:[#allocation4 + $0x18] sm:$0xf]
    %v792 = vld [vmem:[#allocation4 + $0x1c] sm:$0xf]
    %v793 = vld [vmem:[#allocation4 + $0x20] sm:$0xf]
    %v794 = vld [vmem:[#allocation4 + $0x24] sm:$0xf]
    %v795 = vld [vmem:[#allocation4 + $0x28] sm:$0xf]
    %v796 = vld [vmem:[#allocation4 + $0x2c] sm:$0xf]
    %v797 = vld [vmem:[#allocation4 + $0x30] sm:$0xf]
    %v798 = vld [vmem:[#allocation4 + $0x34] sm:$0xf]
    %v799 = vld [vmem:[#allocation4 + $0x38] sm:$0xf]
    %v800 = vld [vmem:[#allocation4 + $0x3c] sm:$0xf]
    %v801 = vld [vmem:[#allocation4 + $0x40] sm:$0xf]
    %v802 = vld [vmem:[#allocation4 + $0x44] sm:$0xf]
    %v803 = vld [vmem:[#allocation4 + $0x48] sm:$0xf]
    %v804 = vld [vmem:[#allocation4 + $0x4c] sm:$0xf]
    %v805 = vld [vmem:[#allocation4 + $0x50] sm:$0xf]
    %v806 = vld [vmem:[#allocation4 + $0x54] sm:$0xf]
    %v807 = vld [vmem:[#allocation4 + $0x58] sm:$0xf]
    %v808 = vld [vmem:[#allocation4 + $0x5c] sm:$0xf]
    %v809 = vld [vmem:[#allocation4 + $0x60] sm:$0xf]
    %v810 = vld [vmem:[#allocation4 + $0x64] sm:$0xf]
    %v811 = vld [vmem:[#allocation4 + $0x68] sm:$0xf]
    %v812 = vld [vmem:[#allocation4 + $0x6c] sm:$0xf]
    %v813 = vld [vmem:[#allocation4 + $0x70] sm:$0xf]
    %v814 = vld [vmem:[#allocation4 + $0x74] sm:$0xf]
    %v815 = vld [vmem:[#allocation4 + $0x78] sm:$0xf]
    %v816 = vld [vmem:[#allocation4 + $0x7c] sm:$0xf]
    %v817 = vld [vmem:[%s2] sm:$0x1]
    %v819 = vlaneseq
    %v820 = vshrl.u32 %v819, 7
    %v821 = vsub.s32 0, %v820
    %v822 = vrot.slane %v817, %v821
    %v840 = vunpack.c.l.b16 %v769
    %v841 = vunpack.c.h.b16 %v769
    %v842 = vunpack.c.l.b16 %v770
    %v843 = vunpack.c.h.b16 %v770
    %v844 = vunpack.c.l.b16 %v771
    %v845 = vunpack.c.h.b16 %v771
    %v846 = vunpack.c.l.b16 %v772
    %v847 = vunpack.c.h.b16 %v772
    %v848 = vunpack.c.l.b16 %v773
    %v849 = vunpack.c.h.b16 %v773
    %v850 = vunpack.c.l.b16 %v774
    %v851 = vunpack.c.h.b16 %v774
    %v852 = vunpack.c.l.b16 %v775
    %v853 = vunpack.c.h.b16 %v775
    %v854 = vunpack.c.l.b16 %v776
    %v855 = vunpack.c.h.b16 %v776
    %v856 = vunpack.c.l.b16 %v777
    %v857 = vunpack.c.h.b16 %v777
    %v858 = vunpack.c.l.b16 %v778
    %v859 = vunpack.c.h.b16 %v778
    %v860 = vunpack.c.l.b16 %v779
    %v861 = vunpack.c.h.b16 %v779
    %v862 = vunpack.c.l.b16 %v780
    %v863 = vunpack.c.h.b16 %v780
    %v864 = vunpack.c.l.b16 %v781
    %v865 = vunpack.c.h.b16 %v781
    %v866 = vunpack.c.l.b16 %v782
    %v867 = vunpack.c.h.b16 %v782
    %v868 = vunpack.c.l.b16 %v783
    %v869 = vunpack.c.h.b16 %v783
    %v870 = vunpack.c.l.b16 %v784
    %v871 = vunpack.c.h.b16 %v784
    %v872 = vpack.c.b16 %v842, %v840
    %v873 = vpack.c.b16 %v843, %v841
    %v874 = vpack.c.b16 %v846, %v844
    %v875 = vpack.c.b16 %v847, %v845
    %v876 = vpack.c.b16 %v850, %v848
    %v877 = vpack.c.b16 %v851, %v849
    %v878 = vpack.c.b16 %v854, %v852
    %v879 = vpack.c.b16 %v855, %v853
    %v880 = vpack.c.b16 %v858, %v856
    %v881 = vpack.c.b16 %v859, %v857
    %v882 = vpack.c.b16 %v862, %v860
    %v883 = vpack.c.b16 %v863, %v861
    %v884 = vpack.c.b16 %v866, %v864
    %v885 = vpack.c.b16 %v867, %v865
    %v886 = vpack.c.b16 %v870, %v868
    %v887 = vpack.c.b16 %v871, %v869
    %v936 = vunpack.c.l.b16 %v785
    %v937 = vunpack.c.l.b16 %v786
    %v938 = vunpack.c.l.b16 %v787
    %v939 = vunpack.c.l.b16 %v788
    %v940 = vunpack.c.l.b16 %v789
    %v941 = vunpack.c.l.b16 %v790
    %v942 = vunpack.c.l.b16 %v791
    %v943 = vunpack.c.l.b16 %v792
    %v944 = vunpack.c.l.b16 %v793
    %v945 = vunpack.c.l.b16 %v794
    %v946 = vunpack.c.l.b16 %v795
    %v947 = vunpack.c.l.b16 %v796
    %v948 = vunpack.c.l.b16 %v797
    %v949 = vunpack.c.l.b16 %v798
    %v950 = vunpack.c.l.b16 %v799
    %v951 = vunpack.c.l.b16 %v800
    %v952 = vunpack.c.l.b16 %v801
    %v953 = vunpack.c.l.b16 %v802
    %v954 = vunpack.c.l.b16 %v803
    %v955 = vunpack.c.l.b16 %v804
    %v956 = vunpack.c.l.b16 %v805
    %v957 = vunpack.c.l.b16 %v806
    %v958 = vunpack.c.l.b16 %v807
    %v959 = vunpack.c.l.b16 %v808
    %v960 = vunpack.c.l.b16 %v809
    %v961 = vunpack.c.l.b16 %v810
    %v962 = vunpack.c.l.b16 %v811
    %v963 = vunpack.c.l.b16 %v812
    %v964 = vunpack.c.l.b16 %v813
    %v965 = vunpack.c.l.b16 %v814
    %v966 = vunpack.c.l.b16 %v815
    %v967 = vunpack.c.l.b16 %v816
    %v968 = vpack.c.b16 %v937, %v936
    %v969 = vpack.c.b16 %v939, %v938
    %v970 = vpack.c.b16 %v941, %v940
    %v971 = vpack.c.b16 %v943, %v942
    %v972 = vpack.c.b16 %v945, %v944
    %v973 = vpack.c.b16 %v947, %v946
    %v974 = vpack.c.b16 %v949, %v948
    %v975 = vpack.c.b16 %v951, %v950
    %v976 = vpack.c.b16 %v953, %v952
    %v977 = vpack.c.b16 %v955, %v954
    %v978 = vpack.c.b16 %v957, %v956
    %v979 = vpack.c.b16 %v959, %v958
    %v980 = vpack.c.b16 %v961, %v960
    %v981 = vpack.c.b16 %v963, %v962
    %v982 = vpack.c.b16 %v965, %v964
    %v983 = vpack.c.b16 %v967, %v966
    %1000 = vmatprep.subr.bf16.mxu0 0
    %1001 = vmatpush1.bf16.msra.mxu0 %v975
    %1002 = vmatprep.subr.bf16.mxu0 0
    %1003 = vmatpush1.bf16.msra.mxu0 %v974
    %1004 = vmatprep.subr.bf16.mxu0 0
    %1005 = vmatpush1.bf16.msra.mxu0 %v973
    %1006 = vmatprep.subr.bf16.mxu0 0
    %1007 = vmatpush1.bf16.msra.mxu0 %v972
    %1008 = vmatprep.subr.bf16.mxu0 0
    %1009 = vmatpush1.bf16.msra.mxu0 %v971
    %1010 = vmatprep.subr.bf16.mxu0 0
    %1011 = vmatpush1.bf16.msra.mxu0 %v970
    %1012 = vmatprep.subr.bf16.mxu0 0
    %1013 = vmatpush1.bf16.msra.mxu0 %v969
    %1014 = vmatprep.subr.bf16.mxu0 0
    %1015 = vmatpush1.bf16.msra.mxu0 %v968
    %1016 = vmatprep.subr.bf16.mxu0 0
    %1017 = vmatpush2.bf16.msra.mxu0 %v983
    %1018 = vmatprep.subr.bf16.mxu0 0
    %1019 = vmatpush2.bf16.msra.mxu0 %v982
    %1020 = vmatprep.subr.bf16.mxu0 0
    %1021 = vmatpush2.bf16.msra.mxu0 %v981
    %1022 = vmatprep.subr.bf16.mxu0 0
    %1023 = vmatpush2.bf16.msra.mxu0 %v980
    %1024 = vmatprep.subr.bf16.mxu0 0
    %1025 = vmatpush2.bf16.msra.mxu0 %v979
    %1026 = vmatprep.subr.bf16.mxu0 0
    %1027 = vmatpush2.bf16.msra.mxu0 %v978
    %1028 = vmatprep.subr.bf16.mxu0 0
    %1029 = vmatpush2.bf16.msra.mxu0 %v977
    %1030 = vmatprep.subr.bf16.mxu0 0
    %1031 = vmatpush2.bf16.msra.mxu0 %v976
    %1032 = vmatprep.mubr.bf16.mxu0 %v873
    %1033 = vmatmul.mubr.bf16.gmra.mxu0 %v872
    %v1034 = vpop.f32.mrf.mxu0
    %v1035 = vadd.f32 %v822, %v1034
    %v1036 = vpop.f32.mrf.mxu0
    %v1037 = vpop.f32.mrf.mxu0
    %v1038 = vadd.f32 %v822, %v1037
    %v1039 = vpop.f32.mrf.mxu0
    %1040 = vmatprep.mubr.bf16.mxu0 %v875
    %1041 = vmatmul.mubr.bf16.gmra.mxu0 %v874
    %v1042 = vpop.f32.mrf.mxu0
    %v1043 = vadd.f32 %v822, %v1042
    %v1044 = vpop.f32.mrf.mxu0
    %v1045 = vpop.f32.mrf.mxu0
    %v1046 = vadd.f32 %v822, %v1045
    %v1047 = vpop.f32.mrf.mxu0
    %1048 = vmatprep.mubr.bf16.mxu0 %v877
    %1049 = vmatmul.mubr.bf16.gmra.mxu0 %v876
    %v1050 = vpop.f32.mrf.mxu0
    %v1051 = vadd.f32 %v822, %v1050
    %v1052 = vpop.f32.mrf.mxu0
    %v1053 = vpop.f32.mrf.mxu0
    %v1054 = vadd.f32 %v822, %v1053
    %v1055 = vpop.f32.mrf.mxu0
    %1056 = vmatprep.mubr.bf16.mxu0 %v879
    %1057 = vmatmul.mubr.bf16.gmra.mxu0 %v878
    %v1058 = vpop.f32.mrf.mxu0
    %v1059 = vadd.f32 %v822, %v1058
    %v1060 = vpop.f32.mrf.mxu0
    %v1061 = vpop.f32.mrf.mxu0
    %v1062 = vadd.f32 %v822, %v1061
    %v1063 = vpop.f32.mrf.mxu0
    %1064 = vmatprep.mubr.bf16.mxu0 %v881
    %1065 = vmatmul.mubr.bf16.gmra.mxu0 %v880
    %v1066 = vpop.f32.mrf.mxu0
    %v1067 = vadd.f32 %v822, %v1066
    %v1068 = vpop.f32.mrf.mxu0
    %v1069 = vpop.f32.mrf.mxu0
    %v1070 = vadd.f32 %v822, %v1069
    %v1071 = vpop.f32.mrf.mxu0
    %1072 = vmatprep.mubr.bf16.mxu0 %v883
    %1073 = vmatmul.mubr.bf16.gmra.mxu0 %v882
    %v1074 = vpop.f32.mrf.mxu0
    %v1075 = vadd.f32 %v822, %v1074
    %v1076 = vpop.f32.mrf.mxu0
    %v1077 = vpop.f32.mrf.mxu0
    %v1078 = vadd.f32 %v822, %v1077
    %v1079 = vpop.f32.mrf.mxu0
    %1080 = vmatprep.mubr.bf16.mxu0 %v885
    %1081 = vmatmul.mubr.bf16.gmra.mxu0 %v884
    %v1082 = vpop.f32.mrf.mxu0
    %v1083 = vadd.f32 %v822, %v1082
    %v1084 = vpop.f32.mrf.mxu0
    %v1085 = vpop.f32.mrf.mxu0
    %v1086 = vadd.f32 %v822, %v1085
    %v1087 = vpop.f32.mrf.mxu0
    %1088 = vmatprep.mubr.bf16.mxu0 %v887
    %1089 = vmatmul.mubr.bf16.gmra.mxu0 %v886
    %v1090 = vpop.f32.mrf.mxu0
    %v1091 = vadd.f32 %v822, %v1090
    %v1092 = vpop.f32.mrf.mxu0
    %v1093 = vpop.f32.mrf.mxu0
    %v1094 = vadd.f32 %v822, %v1093
    %v1095 = vpop.f32.mrf.mxu0
    %1096 = vdwg.mxu0
    %1097 = vst [vmem:[%s3] sm:$0xff] %v1035
    %1098 = vst [vmem:[%s3 + $0x8] sm:$0xff] %v1038
    %1099 = vst [vmem:[%s3 + $0x10] sm:$0xff] %v1043
    %1100 = vst [vmem:[%s3 + $0x18] sm:$0xff] %v1046
    %1101 = vst [vmem:[%s3 + $0x20] sm:$0xff] %v1051
    %1102 = vst [vmem:[%s3 + $0x28] sm:$0xff] %v1054
    %1103 = vst [vmem:[%s3 + $0x30] sm:$0xff] %v1059
    %1104 = vst [vmem:[%s3 + $0x38] sm:$0xff] %v1062
    %1105 = vst [vmem:[%s3 + $0x40] sm:$0xff] %v1067
    %1106 = vst [vmem:[%s3 + $0x48] sm:$0xff] %v1070
    %1107 = vst [vmem:[%s3 + $0x50] sm:$0xff] %v1075
    %1108 = vst [vmem:[%s3 + $0x58] sm:$0xff] %v1078
    %1109 = vst [vmem:[%s3 + $0x60] sm:$0xff] %v1083
    %1110 = vst [vmem:[%s3 + $0x68] sm:$0xff] %v1086
    %1111 = vst [vmem:[%s3 + $0x70] sm:$0xff] %v1091
    %1112 = vst [vmem:[%s3 + $0x78] sm:$0xff] %v1094
    // Predicated region
    $region22: #{kan_forward.1} parent=1 // pred_check
      _
    $region23: #{kan_forward.1} parent=1 // pred_check_branch
      %1114 = sbr.rel (0) target = $region25
    $region24: #{kan_forward.1} parent=1 // pred_region
      _
    $region25: #{kan_forward.1} parent=1 // pred_fallthru
      _
    // Predicated region
    $region26: #{kan_forward.1} parent=1 // pred_check
      _
    $region27: #{kan_forward.1} parent=1 // pred_check_branch
      %1116 = sbr.rel (0) target = $region29
    $region28: #{kan_forward.1} parent=1 // pred_region
      _
    $region29: #{kan_forward.1} parent=1 // pred_fallthru
      _
    %1117 = vsyncpa [#allocation5], 1

</llo_original>
